<compile_context>
chip_gen: v6e
topology: v6e:2x2x1
jax: 0.10.0
libtpu: 0.0.40
codegen_flags: <defaults>
</compile_context>

<pallas_src>
import functools
import numpy as np
import jax
import jax.numpy as jnp
from jax.experimental import pallas as pl
from jax.experimental.pallas import tpu as pltpu


def _quantize_hz2bins(sr, n_fft, bands, num_subbands):
    assert len(bands) + 1 == len(num_subbands)
    bands = [0] + list(bands) + [int(sr / 2)]
    bands = np.array(bands) * n_fft / sr
    freq_bins = []
    for i in range(len(num_subbands)):
        start_freq = int(bands[i])
        end_freq = int(bands[i + 1])
        num_bands = num_subbands[i]
        interval = (end_freq - start_freq) / num_bands
        for n in range(num_bands):
            freq_bins.append(int(start_freq + interval * n))
    freq_bins.append(int(n_fft / 2) + 1)
    return freq_bins


def _round_up(x, m):
    return ((x + m - 1) // m) * m


def _pick_row_tile(bt, target=512):
    """Row-tile height: multiple of 8 (<= target) minimizing zero-row padding."""
    if bt <= target:
        return _round_up(bt, 8)
    best_tm, best_pad = target, _round_up(bt, target)
    tm = target
    while tm >= 128:
        pad = _round_up(bt, tm)
        if pad < best_pad or (pad == best_pad and tm > best_tm):
            best_tm, best_pad = tm, pad
        tm -= 128
    return best_tm


def _default_tanh_dtype():
    """bf16 EUP exists on v6e/v7x; keep the tanh argument f32 on v5e and older."""
    try:
        kind = jax.devices()[0].device_kind.lower()
    except Exception:
        return jnp.float32
    if ("v6" in kind) or ("v7" in kind) or ("tpu7" in kind):
        return jnp.bfloat16
    return jnp.float32


def _fused_band_kernel(bids_ref, x_ref, w1_ref, b1_ref, w2_ref, b2_ref, o_ref, *,
                       tanh_dtype):
    """One (band, row-tile) step: LayerNorm -> Linear(fc,4fc) -> tanh -> Linear(4fc,O).

    The LayerNorm affine is pre-folded into (W1, b1).  W2/b2 columns are zero-padded to
    the bucket width, so padded output columns are exact zeros (sliced off outside) --
    keep that invariant if the padding scheme changes.
    """
    del bids_ref  # only consumed by the index_maps (scalar prefetch)
    x = x_ref[0].astype(jnp.float32)                               # (tm, N), f32 LN stats
    mean = jnp.mean(x, axis=-1, keepdims=True)
    var = jnp.mean(jnp.square(x - mean), axis=-1, keepdims=True)   # biased var (torch LN)
    xn = (x - mean) * jax.lax.rsqrt(var + 1e-5)
    # Matmuls with bf16 operands on the MXU, f32 accumulation.
    h = jnp.dot(xn.astype(w1_ref.dtype), w1_ref[0],
                preferred_element_type=jnp.float32) + b1_ref[0]    # (tm, 4fc) f32
    h = jnp.tanh(h.astype(tanh_dtype))                             # EUP; bf16 on v6e/v7x
    y = jnp.dot(h.astype(w2_ref.dtype), w2_ref[0],
                preferred_element_type=jnp.float32) + b2_ref[0]    # (tm, O) f32
    o_ref[0] = y.astype(o_ref.dtype)


def fused_band_mlp(x, band_ids, w1, b1, w2, b2, *, tm, tanh_dtype,
                   vmem_limit_bytes=None):
    """x: (S_total, BT, N); band_ids: (S_k,) int32 rows of x used by this bucket.

    Returns (S_k, BT, O) with O = this bucket's padded out_dim (multiple of 128).
    """
    _, BT, N = x.shape
    Sk, _, H = w1.shape
    O = w2.shape[-1]
    assert BT % tm == 0
    kernel = functools.partial(_fused_band_kernel, tanh_dtype=tanh_dtype)
    # NOTE: keep the row-tile axis LAST.  The weight index_maps are constant over it,
    # so each band's W1/W2 is DMA'd once and stays resident across all its row tiles.
    grid_spec = pltpu.PrefetchScalarGridSpec(
        num_scalar_prefetch=1,
        grid=(Sk, BT // tm),
        in_specs=[
            pl.BlockSpec((1, tm, N), lambda s, i, bids: (bids[s], i, 0)),  # activations
            pl.BlockSpec((1, N, H), lambda s, i, bids: (s, 0, 0)),         # W1 (bf16)
            pl.BlockSpec((1, 1, H), lambda s, i, bids: (s, 0, 0)),         # b1 (f32)
            pl.BlockSpec((1, H, O), lambda s, i, bids: (s, 0, 0)),         # W2 (bf16, padded)
            pl.BlockSpec((1, 1, O), lambda s, i, bids: (s, 0, 0)),         # b2 (f32, padded)
        ],
        out_specs=pl.BlockSpec((1, tm, O), lambda s, i, bids: (s, i, 0)),
    )
    return pl.pallas_call(
        kernel,
        out_shape=jax.ShapeDtypeStruct((Sk, BT, O), jnp.float32),
        grid_spec=grid_spec,
        compiler_params=pltpu.CompilerParams(
            # Band axis "parallel" (v7x megacore shards bands -> each weight fetched once
            # per chip); row-tile axis "arbitrary" (sequential, weights stay resident).
            dimension_semantics=("parallel", "arbitrary"),
            vmem_limit_bytes=vmem_limit_bytes),
    )(band_ids, x, w1, b1, w2, b2)


class MaskEstimationModulePallas:
    def __init__(self, sr, n_fft, channels=2, fc_dim=128,
                 bands=(1000, 4000, 8000, 16000, 20000),
                 num_subbands=(10, 12, 8, 8, 2, 1),
                 key=None, row_tile_target=512, compute_dtype=jnp.bfloat16):
        self.bands = np.array(
            _quantize_hz2bins(sr, n_fft, list(bands), list(num_subbands)))
        assert len(self.bands) == sum(num_subbands) + 1
        self.band_intervals = self.bands[1:] - self.bands[:-1]
        self.channels = channels
        fc = fc_dim * channels
        hidden = 4 * fc
        self.fc = fc
        self.hidden = hidden
        self.row_tile_target = row_tile_target
        self.compute_dtype = compute_dtype
        self.tanh_dtype = _default_tanh_dtype()
        self.num_bands = len(self.band_intervals)
        self.out_dims = [int(iv) * 2 * channels for iv in self.band_intervals]

        # Deterministic synthetic parameter init (not a checkpoint load).
        key = jax.random.PRNGKey(0) if key is None else key
        self.params_f32 = []
        for od in self.out_dims:
            key, k1, k2, k3, k4 = jax.random.split(key, 5)
            ln_w = jnp.ones((1, fc), jnp.float32)            # torch LayerNorm init
            ln_b = jnp.zeros((1, fc), jnp.float32)
            w1 = jax.random.normal(k1, (fc, hidden), jnp.float32) / np.sqrt(fc)
            b1 = jax.random.normal(k2, (1, hidden), jnp.float32) * 0.01
            w2 = jax.random.normal(k3, (hidden, od), jnp.float32) / np.sqrt(hidden)
            b2 = jax.random.normal(k4, (1, od), jnp.float32) * 0.01
            self.params_f32.append((ln_w, ln_b, w1, b1, w2, b2))

        # --- Bucket bands by rounded-up out_dim (multiple of 128, min 128). -----------
        pad_of = [max(128, _round_up(od, 128)) for od in self.out_dims]
        self.buckets = []   # list of (out_pad, [band idx], band_ids(int32), stacked params)
        for pad in sorted(set(pad_of)):
            idxs = [i for i, p in enumerate(pad_of) if p == pad]
            w1s, b1s, w2s, b2s = [], [], [], []
            for i in idxs:
                ln_w, ln_b, w1, b1, w2, b2 = self.params_f32[i]
                # Fold the LayerNorm affine into the first Linear (exact in f32).
                w1f = ln_w.reshape(-1, 1) * w1
                b1f = b1 + ln_b @ w1
                colpad = pad - self.out_dims[i]
                w1s.append(w1f)
                b1s.append(b1f)
                # Zero-padded columns -> exact-zero padded outputs (sliced off in __call__).
                w2s.append(jnp.pad(w2, ((0, 0), (0, colpad))))
                b2s.append(jnp.pad(b2, ((0, 0), (0, colpad))))
            stacked = (
                jnp.stack(w1s).astype(compute_dtype),    # (Sk, fc, 4fc)    bf16
                jnp.stack(b1s),                          # (Sk, 1, 4fc)     f32
                jnp.stack(w2s).astype(compute_dtype),    # (Sk, 4fc, pad)   bf16
                jnp.stack(b2s),                          # (Sk, 1, pad)     f32
            )
            self.buckets.append((pad, idxs, jnp.asarray(idxs, jnp.int32), stacked))

    def __call__(self, q):
        # q: (B, fc_dim*channels, num_total_subbands, T)  == torch q[:, :, i, :] convention.
        B, N, S, T = q.shape
        assert N == self.fc and S == self.num_bands
        BT = B * T
        C = self.channels
        # Single hoisted transpose: (B,N,S,T) -> (S, B*T, N), feature axis last (lane-dense).
        x = jnp.transpose(q, (2, 0, 3, 1)).reshape(S, BT, N)
        tm = _pick_row_tile(BT, self.row_tile_target)
        bt_pad = _round_up(BT, tm)
        if bt_pad != BT:
            # Zero-row padding (LN of a zero row is finite thanks to eps); sliced off below.
            x = jnp.pad(x, ((0, 0), (0, bt_pad - BT), (0, 0)))
        # Raise scoped VMEM only for very large row tiles (v5e default is 16 MiB; tm<=512
        # fits under it for the default band config).
        vmem_limit = 64 * 1024 * 1024 if tm > 512 else None

        band_outs = [None] * S
        for pad, idxs, band_ids, (w1, b1, w2, b2) in self.buckets:
            out = fused_band_mlp(x, band_ids, w1, b1, w2, b2, tm=tm,
                                 tanh_dtype=self.tanh_dtype,
                                 vmem_limit_bytes=vmem_limit)       # (Sk, bt_pad, pad)
            out = out[:, :BT]                                       # drop zero-row padding
            # One rearrange per bucket (not per band):
            # (Sk,B,T,F_pad,C,2) -> (Sk,B,C,F_pad,T,2) -> (Sk, B*C, F_pad, T, 2)
            f_pad = pad // (2 * C)
            y = out.reshape(len(idxs), B, T, f_pad, C, 2)
            y = jnp.transpose(y, (0, 1, 4, 3, 2, 5)).reshape(len(idxs), B * C, f_pad, T, 2)
            for j, i in enumerate(idxs):
                band_outs[i] = y[j, :, : int(self.band_intervals[i])]
        return jnp.concatenate(band_outs, axis=1)                   # torch cat(dim=-3)


def _reference(module, q):
    """Pure-JAX reference of the PyTorch forward, mirroring the kernel's compute-dtype
    policy (bf16 matmul operands, f32 accumulation, tanh in module.tanh_dtype)."""
    B, N, S, T = q.shape
    cd = module.compute_dtype
    outs = []
    for i, f in enumerate(module.band_intervals):
        ln_w, ln_b, w1, b1, w2, b2 = module.params_f32[i]
        x = jnp.transpose(q[:, :, i, :], (0, 2, 1))                 # (B, T, N)
        mean = jnp.mean(x, -1, keepdims=True)
        var = jnp.mean((x - mean) ** 2, -1, keepdims=True)
        xn = (x - mean) * jax.lax.rsqrt(var + 1e-5)
        xn = xn * ln_w + ln_b
        h = jnp.dot(xn.astype(cd), w1.astype(cd),
                    preferred_element_type=jnp.float32) + b1
        h = jnp.tanh(h.astype(module.tanh_dtype))
        out = jnp.dot(h.astype(cd), w2.astype(cd),
                      preferred_element_type=jnp.float32) + b2
        out = out.reshape(B, T, int(f), module.channels, 2)
        out = jnp.transpose(out, (0, 3, 2, 1, 4)).reshape(
            B * module.channels, int(f), T, 2)
        outs.append(out)
    return jnp.concatenate(outs, axis=1)


if __name__ == "__main__":
    # Small config: sr=8000, n_fft=64, bands=[1000,2000], num_subbands=[2,2,2]
    #   -> freq bins [0,4,8,12,16,24,33], 6 subbands, intervals [4,4,4,4,8,9]
    sr, n_fft = 8000, 64
    channels, fc_dim = 2, 16          # fc = fc_dim*channels = 32, hidden = 128
    module = MaskEstimationModulePallas(
        sr, n_fft, channels=channels, fc_dim=fc_dim,
        bands=(1000, 2000), num_subbands=(2, 2, 2))

    B, T = 2, 8
    S = len(module.band_intervals)    # 6
    N = module.fc                     # 32
    q = jax.random.normal(jax.random.PRNGKey(0), (B, N, S, T), jnp.float32)

    fwd = jax.jit(module.__call__)
    out = jax.block_until_ready(fwd(q))
    ref = jax.block_until_ready(_reference(module, q))

    assert out.shape == (B * channels, int(n_fft / 2) + 1, T, 2), out.shape
    np.testing.assert_allclose(np.asarray(out), np.asarray(ref), rtol=1e-3, atol=1e-3)

    print("KERNEL_OK")
</pallas_src>

<mosaic_0001>
module attributes {stable_mosaic.version = 11 : i64} {
  func.func @_fused_band_kernel(%arg0: i32, %arg1: i32, %arg2: memref<6xi32, #tpu.memory_space<smem>>, %arg3: memref<1x16x32xf32, #tpu.memory_space<vmem>>, %arg4: memref<1x32x128xbf16, #tpu.memory_space<vmem>>, %arg5: memref<1x1x128xf32, #tpu.memory_space<vmem>>, %arg6: memref<1x128x128xbf16, #tpu.memory_space<vmem>>, %arg7: memref<1x1x128xf32, #tpu.memory_space<vmem>>, %arg8: memref<1x16x128xf32, #tpu.memory_space<vmem>>) attributes {dimension_semantics = [#tpu.dimension_semantics<parallel>, #tpu.dimension_semantics<arbitrary>], iteration_bounds = array<i64: 6, 1>, scalar_prefetch = 1 : i64, scratch_operands = 0 : i64, tpu.core_type = #tpu.core_type<tc>, window_params = [{transform_indices = @transform_0, window_bounds = array<i64: 1, 16, 32>}, {transform_indices = @transform_1, window_bounds = array<i64: 1, 32, 128>}, {transform_indices = @transform_2, window_bounds = array<i64: 1, 1, 128>}, {transform_indices = @transform_3, window_bounds = array<i64: 1, 128, 128>}, {transform_indices = @transform_4, window_bounds = array<i64: 1, 1, 128>}, {transform_indices = @transform_5, window_bounds = array<i64: 1, 16, 128>}]} {
    %c0 = arith.constant 0 : index
    %c0_0 = arith.constant 0 : index
    %c0_1 = arith.constant 0 : index
    %0 = vector.load %arg3[%c0, %c0_0, %c0_1] : memref<1x16x32xf32, #tpu.memory_space<vmem>>, vector<1x16x32xf32>
    %1 = vector.shape_cast %0 : vector<1x16x32xf32> to vector<16x32xf32>
    %cst = arith.constant dense<0.000000e+00> : vector<16xf32>
    %2 = vector.multi_reduction <add>, %1, %cst [1] : vector<16x32xf32> to vector<16xf32>
    %3 = vector.shape_cast %2 : vector<16xf32> to vector<16x1xf32>
    %cst_2 = arith.constant 3.200000e+01 : f32
    %4 = vector.broadcast %cst_2 : f32 to vector<16x1xf32>
    %5 = arith.divf %3, %4 : vector<16x1xf32>
    %6 = vector.broadcast %5 : vector<16x1xf32> to vector<16x32xf32>
    %7 = arith.subf %1, %6 : vector<16x32xf32>
    %8 = arith.mulf %7, %7 : vector<16x32xf32>
    %cst_3 = arith.constant dense<0.000000e+00> : vector<16xf32>
    %9 = vector.multi_reduction <add>, %8, %cst_3 [1] : vector<16x32xf32> to vector<16xf32>
    %10 = vector.shape_cast %9 : vector<16xf32> to vector<16x1xf32>
    %cst_4 = arith.constant 3.200000e+01 : f32
    %11 = vector.broadcast %cst_4 : f32 to vector<16x1xf32>
    %12 = arith.divf %10, %11 : vector<16x1xf32>
    %13 = vector.broadcast %5 : vector<16x1xf32> to vector<16x32xf32>
    %14 = arith.subf %1, %13 : vector<16x32xf32>
    %cst_5 = arith.constant 9.99999974E-6 : f32
    %15 = vector.broadcast %cst_5 : f32 to vector<16x1xf32>
    %16 = arith.addf %12, %15 : vector<16x1xf32>
    %17 = math.rsqrt %16 : vector<16x1xf32>
    %18 = vector.broadcast %17 : vector<16x1xf32> to vector<16x32xf32>
    %19 = arith.mulf %14, %18 : vector<16x32xf32>
    %20 = arith.truncf %19 : vector<16x32xf32> to vector<16x32xbf16>
    %c0_6 = arith.constant 0 : index
    %c0_7 = arith.constant 0 : index
    %c0_8 = arith.constant 0 : index
    %21 = vector.load %arg4[%c0_6, %c0_7, %c0_8] : memref<1x32x128xbf16, #tpu.memory_space<vmem>>, vector<1x32x128xbf16>
    %22 = vector.shape_cast %21 : vector<1x32x128xbf16> to vector<32x128xbf16>
    %cst_9 = arith.constant dense<0.000000e+00> : vector<16x128xf32>
    %23 = tpu.matmul %20, %22, %cst_9 {dimension_numbers = #tpu.dot_dimension_numbers<[1], [0], [0], [1], [0, 0, 1, 1], [], []>} : vector<16x32xbf16>, vector<32x128xbf16>, vector<16x128xf32> -> vector<16x128xf32>
    %c0_10 = arith.constant 0 : index
    %c0_11 = arith.constant 0 : index
    %c0_12 = arith.constant 0 : index
    %24 = vector.load %arg5[%c0_10, %c0_11, %c0_12] : memref<1x1x128xf32, #tpu.memory_space<vmem>>, vector<1x1x128xf32>
    %25 = vector.shape_cast %24 : vector<1x1x128xf32> to vector<1x128xf32>
    %26 = vector.broadcast %25 : vector<1x128xf32> to vector<16x128xf32>
    %27 = arith.addf %23, %26 : vector<16x128xf32>
    %28 = math.tanh %27 : vector<16x128xf32>
    %29 = arith.truncf %28 : vector<16x128xf32> to vector<16x128xbf16>
    %c0_13 = arith.constant 0 : index
    %c0_14 = arith.constant 0 : index
    %c0_15 = arith.constant 0 : index
    %30 = vector.load %arg6[%c0_13, %c0_14, %c0_15] : memref<1x128x128xbf16, #tpu.memory_space<vmem>>, vector<1x128x128xbf16>
    %31 = vector.shape_cast %30 : vector<1x128x128xbf16> to vector<128x128xbf16>
    %cst_16 = arith.constant dense<0.000000e+00> : vector<16x128xf32>
    %32 = tpu.matmul %29, %31, %cst_16 {dimension_numbers = #tpu.dot_dimension_numbers<[1], [0], [0], [1], [0, 0, 1, 1], [], []>} : vector<16x128xbf16>, vector<128x128xbf16>, vector<16x128xf32> -> vector<16x128xf32>
    %c0_17 = arith.constant 0 : index
    %c0_18 = arith.constant 0 : index
    %c0_19 = arith.constant 0 : index
    %33 = vector.load %arg7[%c0_17, %c0_18, %c0_19] : memref<1x1x128xf32, #tpu.memory_space<vmem>>, vector<1x1x128xf32>
    %34 = vector.shape_cast %33 : vector<1x1x128xf32> to vector<1x128xf32>
    %35 = vector.broadcast %34 : vector<1x128xf32> to vector<16x128xf32>
    %36 = arith.addf %32, %35 : vector<16x128xf32>
    %c0_20 = arith.constant 0 : index
    %c0_21 = arith.constant 0 : index
    %c0_22 = arith.constant 0 : index
    %37 = vector.load %arg8[%c0_20, %c0_21, %c0_22] : memref<1x16x128xf32, #tpu.memory_space<vmem>>, vector<1x16x128xf32>
    %38 = vector.shape_cast %37 : vector<1x16x128xf32> to vector<16x128xf32>
    %39 = vector.shape_cast %36 : vector<16x128xf32> to vector<1x16x128xf32>
    tpu.vector_store %arg8[%c0_20, %c0_21, %c0_22], %39 {strides = array<i32>} : memref<1x16x128xf32, #tpu.memory_space<vmem>>, vector<1x16x128xf32>,
    return
  }
  func.func @transform_0(%arg0: i32, %arg1: i32, %arg2: memref<6xi32, #tpu.memory_space<smem>>) -> (i32, i32, i32) {
    %0 = arith.index_cast %arg0 : i32 to index
    %1 = memref.load %arg2[%0] : memref<6xi32, #tpu.memory_space<smem>>
    %c0_i32 = arith.constant 0 : i32
    %c0_i32_0 = arith.constant 0 : i32
    return %1, %arg1, %c0_i32 : i32, i32, i32
  }
  func.func @transform_1(%arg0: i32, %arg1: i32, %arg2: memref<6xi32, #tpu.memory_space<smem>>) -> (i32, i32, i32) {
    %c0_i32 = arith.constant 0 : i32
    %c0_i32_0 = arith.constant 0 : i32
    %c0_i32_1 = arith.constant 0 : i32
    return %arg0, %c0_i32, %c0_i32_0 : i32, i32, i32
  }
  func.func @transform_2(%arg0: i32, %arg1: i32, %arg2: memref<6xi32, #tpu.memory_space<smem>>) -> (i32, i32, i32) {
    %c0_i32 = arith.constant 0 : i32
    %c0_i32_0 = arith.constant 0 : i32
    %c0_i32_1 = arith.constant 0 : i32
    return %arg0, %c0_i32, %c0_i32_0 : i32, i32, i32
  }
  func.func @transform_3(%arg0: i32, %arg1: i32, %arg2: memref<6xi32, #tpu.memory_space<smem>>) -> (i32, i32, i32) {
    %c0_i32 = arith.constant 0 : i32
    %c0_i32_0 = arith.constant 0 : i32
    %c0_i32_1 = arith.constant 0 : i32
    return %arg0, %c0_i32, %c0_i32_0 : i32, i32, i32
  }
  func.func @transform_4(%arg0: i32, %arg1: i32, %arg2: memref<6xi32, #tpu.memory_space<smem>>) -> (i32, i32, i32) {
    %c0_i32 = arith.constant 0 : i32
    %c0_i32_0 = arith.constant 0 : i32
    %c0_i32_1 = arith.constant 0 : i32
    return %arg0, %c0_i32, %c0_i32_0 : i32, i32, i32
  }
  func.func @transform_5(%arg0: i32, %arg1: i32, %arg2: memref<6xi32, #tpu.memory_space<smem>>) -> (i32, i32, i32) {
    %c0_i32 = arith.constant 0 : i32
    %c0_i32_0 = arith.constant 0 : i32
    return %arg0, %arg1, %c0_i32 : i32, i32, i32
  }
}

</mosaic_0001>

<llo_original>
// kernel: a_call__.1
$region0: #{a_call__.1}
  #allocation0 [shape = 'u32[]', space=smem, size = 0x4, offset = 0x4, fixed_abs, tag = 'smem constant byte address 0x4 - core index']
  #allocation1 [shape = 'u32[144,128]{1,0:T(1,128)}', space=vmem, size = 0x12000, scoped, tag = 'internal scratch']
  #allocation2 [shape = 's32[1]{0}', space=sflag, size = 0x4, scoped, tag = 'scoped memory for a_call__.1']
  #allocation3 [shape = 'u8[512]{0}', space=smem, size = 0x200, scoped, tag = 'prefetched SMEM operand 0']
  %s0 = inlined_call_operand.vmem [shape: s32[6], index: 0, kind: input, shape index: {}]
  %s1 = inlined_call_operand.vmem [shape: f32[6,16,32], index: 1, kind: input, shape index: {}]
  %s2 = inlined_call_operand.vmem [shape: bf16[6,32,128], index: 2, kind: input, shape index: {}]
  %s3 = inlined_call_operand.vmem [shape: f32[6,1,128], index: 3, kind: input, shape index: {}]
  %s4 = inlined_call_operand.hbm [shape: bf16[6,128,128], index: 4, kind: input, shape index: {}]
  %s5 = inlined_call_operand.vmem [shape: f32[6,1,128], index: 5, kind: input, shape index: {}]
  %s6 = inlined_call_operand.vmem [shape: f32[6,16,128], index: 6, kind: output, shape index: {}]
  %s7 = sld [smem:[#allocation0]]
  $region57: #{a_call__.1} parent=0
    _
  %s9 = ssub.s32 1, %s7
  %s10 = scalar_select 0, %s9, %s7
  %s11 = sshll.u32 %s0, 4
  %s12 = int_to_ptr.vmem [resolvable:$true] %s11
  %14 = dma.vmem_to_smem %s12, 16, [#allocation3], [#allocation2]
  %15 = dma.done [#allocation2], 16
  %16 = sfence
  $region1: #{a_call__.1} parent=0
    #allocation4 [shape = 'u8[65536]{0}', space=vmem, size = 0x10000, scoped, tag = 'input window, operand 4']
    #allocation5 [shape = 's32[2]{0}', space=sflag, size = 0x8, scoped, tag = 'scoped memory for a_call__.1']
    %17 = vsyncpa [#allocation5], 0
    %s18 = scalar_lea.sflag [#allocation5], 1
    %19 = vsyncpa %s18, 0
    loop: start=0, step=1, limit=8
    $region2: #{a_call__.1} parent=1 // loop_pre_header
      _
    $region3: #{a_call__.1} parent=1 // loop_header
      %s21 = sphi 0, %s25
      %p22 = scmp.ge.s32.totalorder %s21, 8
      %s28 = sphi 0, %s40
      %s29 = sphi 0, %s36
      %s30 = sphi 0, %s28
      %s31 = sphi 0, %s29
      %s32 = sphi 0, %s30
      %s33 = sphi 0, %s31
      %s47 = sphi 0, %s49
      %s50 = sphi 0, %s47
      %s51 = sphi 0, %s50
      %s67 = sphi 0, %s51
      %s73 = sphi 0, %s75
      %s76 = sphi 0, %s73
      %s77 = sphi 0, %s76
      %s93 = sphi 0, %s77
      %s99 = sphi 0, %s101
      %s102 = sphi 0, %s99
      %s103 = sphi 0, %s102
      %s119 = sphi 0, %s103
      %s125 = sphi 0, %s127
      %s128 = sphi 0, %s125
      %s129 = sphi 0, %s128
      %s145 = sphi 0, %s129
      %s151 = sphi 0, %s153
      %s154 = sphi 0, %s151
      %s155 = sphi 0, %s154
      %s171 = sphi 0, %s155
      %s179 = sphi 0, %s181
      %s182 = sphi 0, %s179
      %s183 = sphi 0, %s182
      %s199 = sphi 0, %s183
    $region4: #{a_call__.1} parent=1 // loop_header_branch
      %24 = sbr.rel (%p22) target = $region8
    $region5: #{a_call__.1} parent=1 // loop_body
      %s26 = ssub.s32 %s21, 1
      %s27 = ssub.s32 %s21, 2
      %s34 = sadd.s32 1, %s29
      %p35 = scmp.ge.s32.totalorder %s34, 1
      %s36 = scalar_select %p35, 0, %s34
      %s37 = sadd.s32 1, %s28
      %s38 = scalar_select %p35, %s37, %s28
      %p39 = scmp.ge.s32.totalorder %s38, 6
      %s40 = scalar_select %p39, 0, %s38
      %s41 = sld [smem:[#allocation3 + %s28]]
      %s42 = sld [smem:[#allocation3 + %s40]]
      %s43 = ssub.s32 %s41, %s42
      %s44 = ssub.s32 %s29, %s36
      %s45 = sor.u32 %s43, %s44
      %p46 = scmp.eq.s32.totalorder %s45, 0
      %s48 = sadd.s32 %s47, 1
      %s49 = scalar_select %p46, %s47, %s48
      %p52 = pneg %p46
      %p53 = scmp.eq.s32.totalorder %s21, 5
      %p54 = por %p52, %p53
      %p55 = scmp.ne.s32.totalorder %s47, %s50
      %p56 = scmp.eq.s32.totalorder %s21, 0
      %p57 = por %p55, %p56
      %p58 = scmp.ne.s32.totalorder %s47, %s50
      %p59 = scmp.eq.s32.totalorder %s26, 5
      %p60 = por %p58, %p59
      %p61 = scmp.ne.s32.totalorder %s50, %s51
      %p62 = scmp.eq.s32.totalorder %s26, 0
      %p63 = por %p61, %p62
      %p64 = scmp.ne.s32.totalorder %s50, %s51
      %p65 = scmp.eq.s32.totalorder %s27, 5
      %p66 = por %p64, %p65
      %p68 = scmp.ne.s32.totalorder %s51, %s67
      %p69 = scmp.eq.s32.totalorder %s27, 0
      %p70 = por %p68, %p69
      %s71 = ssub.s32 %s28, %s40
      %p72 = scmp.eq.s32.totalorder %s71, 0
      %s74 = sadd.s32 %s73, 1
      %s75 = scalar_select %p72, %s73, %s74
      %p78 = pneg %p72
      %p79 = scmp.eq.s32.totalorder %s21, 5
      %p80 = por %p78, %p79
      %p81 = scmp.ne.s32.totalorder %s73, %s76
      %p82 = scmp.eq.s32.totalorder %s21, 0
      %p83 = por %p81, %p82
      %p84 = scmp.ne.s32.totalorder %s73, %s76
      %p85 = scmp.eq.s32.totalorder %s26, 5
      %p86 = por %p84, %p85
      %p87 = scmp.ne.s32.totalorder %s76, %s77
      %p88 = scmp.eq.s32.totalorder %s26, 0
      %p89 = por %p87, %p88
      %p90 = scmp.ne.s32.totalorder %s76, %s77
      %p91 = scmp.eq.s32.totalorder %s27, 5
      %p92 = por %p90, %p91
      %p94 = scmp.ne.s32.totalorder %s77, %s93
      %p95 = scmp.eq.s32.totalorder %s27, 0
      %p96 = por %p94, %p95
      %s97 = ssub.s32 %s28, %s40
      %p98 = scmp.eq.s32.totalorder %s97, 0
      %s100 = sadd.s32 %s99, 1
      %s101 = scalar_select %p98, %s99, %s100
      %p104 = pneg %p98
      %p105 = scmp.eq.s32.totalorder %s21, 5
      %p106 = por %p104, %p105
      %p107 = scmp.ne.s32.totalorder %s99, %s102
      %p108 = scmp.eq.s32.totalorder %s21, 0
      %p109 = por %p107, %p108
      %p110 = scmp.ne.s32.totalorder %s99, %s102
      %p111 = scmp.eq.s32.totalorder %s26, 5
      %p112 = por %p110, %p111
      %p113 = scmp.ne.s32.totalorder %s102, %s103
      %p114 = scmp.eq.s32.totalorder %s26, 0
      %p115 = por %p113, %p114
      %p116 = scmp.ne.s32.totalorder %s102, %s103
      %p117 = scmp.eq.s32.totalorder %s27, 5
      %p118 = por %p116, %p117
      %p120 = scmp.ne.s32.totalorder %s103, %s119
      %p121 = scmp.eq.s32.totalorder %s27, 0
      %p122 = por %p120, %p121
      %s123 = ssub.s32 %s28, %s40
      %p124 = scmp.eq.s32.totalorder %s123, 0
      %s126 = sadd.s32 %s125, 1
      %s127 = scalar_select %p124, %s125, %s126
      %p130 = pneg %p124
      %p131 = scmp.eq.s32.totalorder %s21, 5
      %p132 = por %p130, %p131
      %p133 = scmp.ne.s32.totalorder %s125, %s128
      %p134 = scmp.eq.s32.totalorder %s21, 0
      %p135 = por %p133, %p134
      %p136 = scmp.ne.s32.totalorder %s125, %s128
      %p137 = scmp.eq.s32.totalorder %s26, 5
      %p138 = por %p136, %p137
      %p139 = scmp.ne.s32.totalorder %s128, %s129
      %p140 = scmp.eq.s32.totalorder %s26, 0
      %p141 = por %p139, %p140
      %p142 = scmp.ne.s32.totalorder %s128, %s129
      %p143 = scmp.eq.s32.totalorder %s27, 5
      %p144 = por %p142, %p143
      %p146 = scmp.ne.s32.totalorder %s129, %s145
      %p147 = scmp.eq.s32.totalorder %s27, 0
      %p148 = por %p146, %p147
      %s149 = ssub.s32 %s28, %s40
      %p150 = scmp.eq.s32.totalorder %s149, 0
      %s152 = sadd.s32 %s151, 1
      %s153 = scalar_select %p150, %s151, %s152
      %p156 = pneg %p150
      %p157 = scmp.eq.s32.totalorder %s21, 5
      %p158 = por %p156, %p157
      %p159 = scmp.ne.s32.totalorder %s151, %s154
      %p160 = scmp.eq.s32.totalorder %s21, 0
      %p161 = por %p159, %p160
      %p162 = scmp.ne.s32.totalorder %s151, %s154
      %p163 = scmp.eq.s32.totalorder %s26, 5
      %p164 = por %p162, %p163
      %p165 = scmp.ne.s32.totalorder %s154, %s155
      %p166 = scmp.eq.s32.totalorder %s26, 0
      %p167 = por %p165, %p166
      %p168 = scmp.ne.s32.totalorder %s154, %s155
      %p169 = scmp.eq.s32.totalorder %s27, 5
      %p170 = por %p168, %p169
      %p172 = scmp.ne.s32.totalorder %s155, %s171
      %p173 = scmp.eq.s32.totalorder %s27, 0
      %p174 = por %p172, %p173
      %s175 = ssub.s32 %s28, %s40
      %s176 = ssub.s32 %s29, %s36
      %s177 = sor.u32 %s175, %s176
      %p178 = scmp.eq.s32.totalorder %s177, 0
      %s180 = sadd.s32 %s179, 1
      %s181 = scalar_select %p178, %s179, %s180
      %p184 = pneg %p178
      %p185 = scmp.eq.s32.totalorder %s21, 5
      %p186 = por %p184, %p185
      %p187 = scmp.ne.s32.totalorder %s179, %s182
      %p188 = scmp.eq.s32.totalorder %s21, 0
      %p189 = por %p187, %p188
      %p190 = scmp.ne.s32.totalorder %s179, %s182
      %p191 = scmp.eq.s32.totalorder %s26, 5
      %p192 = por %p190, %p191
      %p193 = scmp.ne.s32.totalorder %s182, %s183
      %p194 = scmp.eq.s32.totalorder %s26, 0
      %p195 = por %p193, %p194
      %p196 = scmp.ne.s32.totalorder %s182, %s183
      %p197 = scmp.eq.s32.totalorder %s27, 5
      %p198 = por %p196, %p197
      %p200 = scmp.ne.s32.totalorder %s183, %s199
      %p201 = scmp.eq.s32.totalorder %s27, 0
      %p202 = por %p200, %p201
      %p203 = scmp.le.s32.totalorder 1, %s21
      %p204 = scmp.lt.s32.totalorder %s21, 7
      %p205 = pnand %p203, %p204
      %p206 = pneg %p205
      // Predicated region
      $region9: #{a_call__.1} parent=5 // pred_check
        _
      $region10: #{a_call__.1} parent=5 // pred_check_branch
        %208 = sbr.rel (%p205) target = $region12
      $region11: #{a_call__.1} parent=5 // pred_region
        %s209 = ssub.s32 %s21, 1
      $region12: #{a_call__.1} parent=5 // pred_fallthru
        _
      %p210 = scmp.lt.s32.totalorder %s21, 6
      // Predicated region
      $region13: #{a_call__.1} parent=5 // pred_check
        %p211 = pneg %p210
      $region14: #{a_call__.1} parent=5 // pred_check_branch
        %213 = sbr.rel (%p211) target = $region16
      $region15: #{a_call__.1} parent=5 // pred_region
        // Predicated region
        $region17: #{a_call__.1} parent=15 // pred_check
          %p214 = pneg %p57
        $region18: #{a_call__.1} parent=15 // pred_check_branch
          %216 = sbr.rel (%p214) target = $region20
        $region19: #{a_call__.1} parent=15 // pred_region
          %s217 = sld [smem:[#allocation3 + %s28]]
          %s218 = smul.u32 2, %s29
          %p219 = scmp.lt.s32.totalorder %s217, 5
          %s220 = scalar_select %p219, %s217, 5
          %p221 = scmp.lt.s32.totalorder %s218, 1
          %s222 = scalar_select %p221, %s218, 1
          %s223 = smul.addr %s220, 2
          %s224 = sadd.s32 %s222, %s223
          %s225 = smul.addr %s224, 8
          %s226 = scalar_lea.vmem %s1, %s225
          %s227 = sld [smem:[#allocation3 + %s28]]
          %s228 = smul.u32 2, %s29
        $region20: #{a_call__.1} parent=15 // pred_fallthru
          _
        // Predicated region
        $region21: #{a_call__.1} parent=15 // pred_check
          %p229 = pneg %p83
        $region22: #{a_call__.1} parent=15 // pred_check_branch
          %231 = sbr.rel (%p229) target = $region24
        $region23: #{a_call__.1} parent=15 // pred_region
          %p232 = scmp.lt.s32.totalorder %s28, 5
          %s233 = scalar_select %p232, %s28, 5
          %s234 = smul.addr %s233, 4
          %s235 = smul.addr %s234, 4
          %s236 = scalar_lea.vmem %s2, %s235
        $region24: #{a_call__.1} parent=15 // pred_fallthru
          _
        // Predicated region
        $region25: #{a_call__.1} parent=15 // pred_check
          %p237 = pneg %p109
        $region26: #{a_call__.1} parent=15 // pred_check_branch
          %239 = sbr.rel (%p237) target = $region28
        $region27: #{a_call__.1} parent=15 // pred_region
          %p240 = scmp.lt.s32.totalorder %s28, 5
          %s241 = scalar_select %p240, %s28, 5
          %s242 = scalar_lea.vmem %s3, %s241
        $region28: #{a_call__.1} parent=15 // pred_fallthru
          _
        // Predicated region
        $region29: #{a_call__.1} parent=15 // pred_check
          %p243 = pneg %p135
        $region30: #{a_call__.1} parent=15 // pred_check_branch
          %245 = sbr.rel (%p243) target = $region32
        $region31: #{a_call__.1} parent=15 // pred_region
          %s246 = sand.u32 %s125, 1
          %s247 = scalar_lea.sflag [#allocation5], %s246
          %s248 = sand.u32 %s125, 1
          %s249 = smul.addr %s248, 64
          %s250 = scalar_lea.vmem [#allocation4], %s249
          %s252 = ssub.s32 1024, 1024
          %253 = vsyncadd %s247, %s252
          %s254 = smul.addr %s28, 16
          %s255 = smul.addr %s254, 64
          %s256 = scalar_lea.hbm %s4, %s255
          %s257 = sshll.u32 %s250, 4
          %s258 = int_to_ptr.vmem [resolvable:$true] %s257
          %263 = dma.hbm_to_vmem [thread:$0]  %s256, 1024, %s258, %s247, 64, 64, 4
        $region32: #{a_call__.1} parent=15 // pred_fallthru
          _
        // Predicated region
        $region33: #{a_call__.1} parent=15 // pred_check
          %p264 = pneg %p161
        $region34: #{a_call__.1} parent=15 // pred_check_branch
          %266 = sbr.rel (%p264) target = $region36
        $region35: #{a_call__.1} parent=15 // pred_region
          %p267 = scmp.lt.s32.totalorder %s28, 5
          %s268 = scalar_select %p267, %s28, 5
          %s269 = scalar_lea.vmem %s5, %s268
        $region36: #{a_call__.1} parent=15 // pred_fallthru
          _
      $region16: #{a_call__.1} parent=5 // pred_fallthru
        _
      %p270 = scmp.le.s32.totalorder 1, %s21
      %p271 = scmp.lt.s32.totalorder %s21, 7
      %p272 = pnand %p270, %p271
      %p273 = pneg %p272
      // Predicated region
      $region37: #{a_call__.1} parent=5 // pred_check
        _
      $region38: #{a_call__.1} parent=5 // pred_check_branch
        %275 = sbr.rel (%p272) target = $region40
      $region39: #{a_call__.1} parent=5 // pred_region
        %s276 = ssub.s32 %s21, 1
        %s277 = sand.u32 %s128, 1
        %s278 = scalar_lea.sflag [#allocation5], %s277
        %s279 = sand.u32 %s128, 1
        %s280 = smul.addr %s279, 64
        %s281 = scalar_lea.vmem [#allocation4], %s280
        // Predicated region
        $region41: #{a_call__.1} parent=39 // pred_check
          %p282 = pneg %p141
        $region42: #{a_call__.1} parent=39 // pred_check_branch
          %284 = sbr.rel (%p282) target = $region44
        $region43: #{a_call__.1} parent=39 // pred_region
          %285 = dma.done %s278, 1024
        $region44: #{a_call__.1} parent=39 // pred_fallthru
          _
        %s286 = sld [smem:[#allocation3 + %s30]]
        %s287 = smul.u32 2, %s31
        %p288 = scmp.lt.s32.totalorder %s286, 5
        %s289 = scalar_select %p288, %s286, 5
        %p290 = scmp.lt.s32.totalorder %s287, 1
        %s291 = scalar_select %p290, %s287, 1
        %s292 = smul.addr %s289, 2
        %s293 = sadd.s32 %s291, %s292
        %s294 = smul.addr %s293, 8
        %s295 = scalar_lea.vmem %s1, %s294
        %p296 = pneg %p63
        %p297 = pneg %p60
        %p298 = scmp.lt.s32.totalorder %s30, 5
        %s299 = scalar_select %p298, %s30, 5
        %s300 = smul.addr %s299, 4
        %s301 = smul.addr %s300, 4
        %s302 = scalar_lea.vmem %s2, %s301
        %p303 = pneg %p89
        %p304 = pneg %p86
        %p305 = scmp.lt.s32.totalorder %s30, 5
        %s306 = scalar_select %p305, %s30, 5
        %s307 = scalar_lea.vmem %s3, %s306
        %p308 = pneg %p115
        %p309 = pneg %p112
        %s310 = sand.u32 %s128, 1
        %s311 = scalar_lea.sflag [#allocation5], %s310
        %s312 = sand.u32 %s128, 1
        %s313 = smul.addr %s312, 64
        %s314 = scalar_lea.vmem [#allocation4], %s313
        %p315 = pneg %p141
        %p316 = pneg %p138
        %p317 = scmp.lt.s32.totalorder %s30, 5
        %s318 = scalar_select %p317, %s30, 5
        %s319 = scalar_lea.vmem %s5, %s318
        %p320 = pneg %p167
        %p321 = pneg %p164
        %p322 = pneg %p195
        %p323 = pneg %p192
        %s324 = smul.u32 2, %s31
        %p325 = scmp.lt.s32.totalorder %s30, 5
        %s326 = scalar_select %p325, %s30, 5
        %p327 = scmp.lt.s32.totalorder %s324, 1
        %s328 = scalar_select %p327, %s324, 1
        %s329 = smul.addr %s326, 2
        %s330 = sadd.s32 %s328, %s329
        %s331 = smul.addr %s330, 8
        %s332 = scalar_lea.vmem %s6, %s331
        %s333 = sld [smem:[#allocation3 + %s30]]
        %s334 = smul.u32 2, %s31
        %p335 = scmp.lt.s32.totalorder %s333, 5
        %s336 = scalar_select %p335, %s333, 5
        %p337 = scmp.lt.s32.totalorder %s334, 1
        %s338 = scalar_select %p337, %s334, 1
        %s339 = smul.addr %s336, 2
        %s340 = sadd.s32 %s338, %s339
        %s341 = smul.addr %s340, 8
        %s342 = scalar_lea.vmem %s1, %s341
        %s343 = sld [smem:[#allocation3 + %s30]]
        %s344 = smul.u32 2, %s31
        %p345 = scmp.lt.s32.totalorder %s30, 5
        %s346 = scalar_select %p345, %s30, 5
        %s347 = smul.addr %s346, 4
        %s348 = smul.addr %s347, 4
        %s349 = scalar_lea.vmem %s2, %s348
        %p350 = scmp.lt.s32.totalorder %s30, 5
        %s351 = scalar_select %p350, %s30, 5
        %s352 = scalar_lea.vmem %s3, %s351
        %p353 = scmp.lt.s32.totalorder %s30, 5
        %s354 = scalar_select %p353, %s30, 5
        %s355 = scalar_lea.vmem %s5, %s354
        %s356 = smul.u32 2, %s31
        %p357 = scmp.lt.s32.totalorder %s30, 5
        %s358 = scalar_select %p357, %s30, 5
        %p359 = scmp.lt.s32.totalorder %s356, 1
        %s360 = scalar_select %p359, %s356, 1
        %s361 = smul.addr %s358, 2
        %s362 = sadd.s32 %s360, %s361
        %s363 = smul.addr %s362, 8
        %s364 = scalar_lea.vmem %s6, %s363
        %s365 = smul.u32 2, %s31
        %v367 = vld [vmem:[%s342] sm:$0xff]
        %v368 = vld [vmem:[%s342 + $0x8] sm:$0xff]
        %vm369 = vcmask 261120
        %v370 = vsel %vm369, %v367, 0.0
        %371 = vadd.xlane.f32.xlu0 %v370
        %v372 = vpop.xlane.xlu0 %371
        %v373 = vsel %vm369, %v368, 0.0
        %374 = vadd.xlane.f32.xlu0 %v373
        %v375 = vpop.xlane.xlu0 %374
        %v376 = vrcp.pop 32.0
        %v377 = vmul.f32 %v372, %v376
        %v378 = vmul.f32 %v375, %v376
        %v379 = vsub.f32 %v367, %v377
        %v380 = vsub.f32 %v368, %v378
        %v381 = vmul.f32 %v379, %v379
        %v382 = vmul.f32 %v380, %v380
        %v383 = vsel %vm369, %v381, 0.0
        %384 = vadd.xlane.f32.xlu0 %v383
        %v385 = vpop.xlane.xlu0 %384
        %v386 = vsel %vm369, %v382, 0.0
        %387 = vadd.xlane.f32.xlu0 %v386
        %v388 = vpop.xlane.xlu0 %387
        %v389 = vmul.f32 %v385, %v376
        %v390 = vmul.f32 %v388, %v376
        %v391 = vadd.f32 %v389, 1e-05
        %v392 = vadd.f32 %v390, 1e-05
        %v393 = vrsqrt.pop %v391
        %v394 = vrsqrt.pop %v392
        %v395 = vmul.f32 %v379, %v393
        %v396 = vmul.f32 %v380, %v394
        %v397 = vpack.c.bf16 %v396, %v395
        %v398 = vld [vmem:[%s349] sm:$0xf]
        %v399 = vld [vmem:[%s349 + $0x4] sm:$0xf]
        %v400 = vld [vmem:[%s349 + $0x8] sm:$0xf]
        %v401 = vld [vmem:[%s349 + $0xc] sm:$0xf]
        %v402 = vld [vmem:[%s352] sm:$0x1]
        %v404 = vlaneseq
        %v405 = vshrl.u32 %v404, 7
        %v406 = vsub.s32 0, %v405
        %v407 = vrot.slane %v402, %v406
        %v413 = vunpack.c.l.b16 %v398
        %v414 = vunpack.c.l.b16 %v399
        %v415 = vunpack.c.l.b16 %v400
        %v416 = vunpack.c.l.b16 %v401
        %v417 = vpack.c.b16 %v414, %v413
        %v418 = vpack.c.b16 %v416, %v415
        %v422 = vsel %vm369, %v397, 0
        %424 = vmatprep.subr.bf16.mxu0 0
        %425 = vmatpush1.bf16.msra.mxu0 0
        %426 = vmatprep.subr.bf16.mxu0 0
        %427 = vmatpush1.bf16.msra.mxu0 0
        %428 = vmatprep.subr.bf16.mxu0 0
        %429 = vmatpush1.bf16.msra.mxu0 0
        %430 = vmatprep.subr.bf16.mxu0 0
        %431 = vmatpush1.bf16.msra.mxu0 0
        %432 = vmatprep.subr.bf16.mxu0 0
        %433 = vmatpush1.bf16.msra.mxu0 0
        %434 = vmatprep.subr.bf16.mxu0 0
        %435 = vmatpush1.bf16.msra.mxu0 0
        %436 = vmatprep.subr.bf16.mxu0 0
        %437 = vmatpush1.bf16.msra.mxu0 %v418
        %438 = vmatprep.subr.bf16.mxu0 0
        %439 = vmatpush1.bf16.msra.mxu0 %v417
        %440 = vmatprep.subr.bf16.mxu0 0
        %441 = vmatpush2.bf16.msra.mxu0 0
        %442 = vmatprep.subr.bf16.mxu0 0
        %443 = vmatpush2.bf16.msra.mxu0 0
        %444 = vmatprep.subr.bf16.mxu0 0
        %445 = vmatpush2.bf16.msra.mxu0 0
        %446 = vmatprep.subr.bf16.mxu0 0
        %447 = vmatpush2.bf16.msra.mxu0 0
        %448 = vmatprep.subr.bf16.mxu0 0
        %449 = vmatpush2.bf16.msra.mxu0 0
        %450 = vmatprep.subr.bf16.mxu0 0
        %451 = vmatpush2.bf16.msra.mxu0 0
        %452 = vmatprep.subr.bf16.mxu0 0
        %453 = vmatpush2.bf16.msra.mxu0 0
        %454 = vmatprep.subr.bf16.mxu0 0
        %455 = vmatpush2.bf16.msra.mxu0 0
        %456 = vmatprep.mubr.bf16.mxu0 0
        %457 = vmatmul.mubr.bf16.gmra.mxu0 %v422
        %v458 = vpop.f32.mrf.mxu0
        %v459 = vadd.f32 %v407, %v458
        %v460 = vpop.f32.mrf.mxu0
        %v461 = vpop.f32.mrf.mxu0
        %v462 = vadd.f32 %v407, %v461
        %v463 = vpop.f32.mrf.mxu0
        %464 = vdwg.mxu0
        %v465 = vtanh.pop %v459
        %v466 = vtanh.pop %v462
        %v467 = vpack.c.bf16 %v466, %v465
        %v468 = vld [vmem:[%s281] sm:$0xf]
        %v469 = vld [vmem:[%s281 + $0x4] sm:$0xf]
        %v470 = vld [vmem:[%s281 + $0x8] sm:$0xf]
        %v471 = vld [vmem:[%s281 + $0xc] sm:$0xf]
        %v472 = vld [vmem:[%s281 + $0x10] sm:$0xf]
        %v473 = vld [vmem:[%s281 + $0x14] sm:$0xf]
        %v474 = vld [vmem:[%s281 + $0x18] sm:$0xf]
        %v475 = vld [vmem:[%s281 + $0x1c] sm:$0xf]
        %v476 = vld [vmem:[%s281 + $0x20] sm:$0xf]
        %v477 = vld [vmem:[%s281 + $0x24] sm:$0xf]
        %v478 = vld [vmem:[%s281 + $0x28] sm:$0xf]
        %v479 = vld [vmem:[%s281 + $0x2c] sm:$0xf]
        %v480 = vld [vmem:[%s281 + $0x30] sm:$0xf]
        %v481 = vld [vmem:[%s281 + $0x34] sm:$0xf]
        %v482 = vld [vmem:[%s281 + $0x38] sm:$0xf]
        %v483 = vld [vmem:[%s281 + $0x3c] sm:$0xf]
        %v484 = vld [vmem:[%s355] sm:$0x1]
        %v486 = vlaneseq
        %v487 = vshrl.u32 %v486, 7
        %v488 = vsub.s32 0, %v487
        %v489 = vrot.slane %v484, %v488
        %v507 = vunpack.c.l.b16 %v468
        %v508 = vunpack.c.l.b16 %v469
        %v509 = vunpack.c.l.b16 %v470
        %v510 = vunpack.c.l.b16 %v471
        %v511 = vunpack.c.l.b16 %v472
        %v512 = vunpack.c.l.b16 %v473
        %v513 = vunpack.c.l.b16 %v474
        %v514 = vunpack.c.l.b16 %v475
        %v515 = vunpack.c.l.b16 %v476
        %v516 = vunpack.c.l.b16 %v477
        %v517 = vunpack.c.l.b16 %v478
        %v518 = vunpack.c.l.b16 %v479
        %v519 = vunpack.c.l.b16 %v480
        %v520 = vunpack.c.l.b16 %v481
        %v521 = vunpack.c.l.b16 %v482
        %v522 = vunpack.c.l.b16 %v483
        %v523 = vpack.c.b16 %v508, %v507
        %v524 = vpack.c.b16 %v510, %v509
        %v525 = vpack.c.b16 %v512, %v511
        %v526 = vpack.c.b16 %v514, %v513
        %v527 = vpack.c.b16 %v516, %v515
        %v528 = vpack.c.b16 %v518, %v517
        %v529 = vpack.c.b16 %v520, %v519
        %v530 = vpack.c.b16 %v522, %v521
        %539 = vmatprep.subr.bf16.mxu0 0
        %540 = vmatpush1.bf16.msra.mxu0 %v530
        %541 = vmatprep.subr.bf16.mxu0 0
        %542 = vmatpush1.bf16.msra.mxu0 %v529
        %543 = vmatprep.subr.bf16.mxu0 0
        %544 = vmatpush1.bf16.msra.mxu0 %v528
        %545 = vmatprep.subr.bf16.mxu0 0
        %546 = vmatpush1.bf16.msra.mxu0 %v527
        %547 = vmatprep.subr.bf16.mxu0 0
        %548 = vmatpush1.bf16.msra.mxu0 %v526
        %549 = vmatprep.subr.bf16.mxu0 0
        %550 = vmatpush1.bf16.msra.mxu0 %v525
        %551 = vmatprep.subr.bf16.mxu0 0
        %552 = vmatpush1.bf16.msra.mxu0 %v524
        %553 = vmatprep.subr.bf16.mxu0 0
        %554 = vmatpush1.bf16.msra.mxu0 %v523
        %555 = vmatprep.subr.bf16.mxu0 0
        %556 = vmatpush2.bf16.msra.mxu0 0
        %557 = vmatprep.subr.bf16.mxu0 0
        %558 = vmatpush2.bf16.msra.mxu0 0
        %559 = vmatprep.subr.bf16.mxu0 0
        %560 = vmatpush2.bf16.msra.mxu0 0
        %561 = vmatprep.subr.bf16.mxu0 0
        %562 = vmatpush2.bf16.msra.mxu0 0
        %563 = vmatprep.subr.bf16.mxu0 0
        %564 = vmatpush2.bf16.msra.mxu0 0
        %565 = vmatprep.subr.bf16.mxu0 0
        %566 = vmatpush2.bf16.msra.mxu0 0
        %567 = vmatprep.subr.bf16.mxu0 0
        %568 = vmatpush2.bf16.msra.mxu0 0
        %569 = vmatprep.subr.bf16.mxu0 0
        %570 = vmatpush2.bf16.msra.mxu0 0
        %571 = vmatprep.mubr.bf16.mxu0 0
        %572 = vmatmul.mubr.bf16.gmra.mxu0 %v467
        %v573 = vpop.f32.mrf.mxu0
        %v574 = vadd.f32 %v489, %v573
        %v575 = vpop.f32.mrf.mxu0
        %v576 = vpop.f32.mrf.mxu0
        %v577 = vadd.f32 %v489, %v576
        %v578 = vpop.f32.mrf.mxu0
        %579 = vdwg.mxu0
        %580 = vst [vmem:[%s364] sm:$0xff] %v574
        %581 = vst [vmem:[%s364 + $0x8] sm:$0xff] %v577
        %s582 = smul.u32 2, %s31
        %p583 = scmp.lt.s32.totalorder %s30, 5
        %s584 = scalar_select %p583, %s30, 5
        %p585 = scmp.lt.s32.totalorder %s582, 1
        %s586 = scalar_select %p585, %s582, 1
        %s587 = smul.addr %s584, 2
        %s588 = sadd.s32 %s586, %s587
        %s589 = smul.addr %s588, 8
        %s590 = scalar_lea.vmem %s6, %s589
        // Predicated region
        $region45: #{a_call__.1} parent=39 // pred_check
          %p591 = pneg %p192
        $region46: #{a_call__.1} parent=39 // pred_check_branch
          %593 = sbr.rel (%p591) target = $region48
        $region47: #{a_call__.1} parent=39 // pred_region
          %s594 = smul.u32 2, %s31
        $region48: #{a_call__.1} parent=39 // pred_fallthru
          _
      $region40: #{a_call__.1} parent=5 // pred_fallthru
        _
      %p595 = scmp.le.s32.totalorder 2, %s21
      // Predicated region
      $region49: #{a_call__.1} parent=5 // pred_check
        %p596 = pneg %p595
      $region50: #{a_call__.1} parent=5 // pred_check_branch
        %598 = sbr.rel (%p596) target = $region52
      $region51: #{a_call__.1} parent=5 // pred_region
        %s599 = ssub.s32 %s21, 2
        // Predicated region
        $region53: #{a_call__.1} parent=51 // pred_check
          %p600 = pneg %p198
        $region54: #{a_call__.1} parent=51 // pred_check_branch
          %602 = sbr.rel (%p600) target = $region56
        $region55: #{a_call__.1} parent=51 // pred_region
          %s603 = smul.u32 2, %s33
          %p604 = scmp.lt.s32.totalorder %s32, 5
          %s605 = scalar_select %p604, %s32, 5
          %p606 = scmp.lt.s32.totalorder %s603, 1
          %s607 = scalar_select %p606, %s603, 1
          %s608 = smul.addr %s605, 2
          %s609 = sadd.s32 %s607, %s608
          %s610 = smul.addr %s609, 8
          %s611 = scalar_lea.vmem %s6, %s610
        $region56: #{a_call__.1} parent=51 // pred_fallthru
          _
      $region52: #{a_call__.1} parent=5 // pred_fallthru
        _
    $region6: #{a_call__.1} parent=1 // loop_footer
      %s25 = sadd.s32 1, %s21
    $region7: #{a_call__.1} parent=1 // loop_footer_branch
      %20 = sbr.rel target = $region3
    $region8: #{a_call__.1} parent=1 // loop_exit
      _
    %612 = vsyncpa [#allocation5], 1
    %s613 = scalar_lea.sflag [#allocation5], 1
    %614 = vsyncpa %s613, 1

</llo_original>
